<compile_context>
chip_gen: v5e
topology: v5e:2x2
jax: 0.10.0
libtpu: 0.0.40
codegen_flags: <defaults>
</compile_context>

<pallas_src>
import math

import jax
import jax.numpy as jnp
from jax.experimental import pallas as pl
from jax.experimental.pallas import tpu as pltpu

IMP_THRESHOLD = 0.5


# --------------------------------------------------------------------------- #
# Pallas kernel
# --------------------------------------------------------------------------- #
def _router_kernel(x_ref,
                   w_all_ref, b_all_ref,     # fused: [router_imp | router_unimp | importance-L1]
                   wi2t_ref, bi2_ref,        # importance second layer (1-wide), VPU path
                   w2_ref, b2_ref,           # block-diagonal router second layers
                   out_ref):                 # [TM, E+1] = probs | importance
    # x is f32 in HBM/VMEM; cast to bf16 here for the MXU operand.
    x = x_ref[...].astype(jnp.bfloat16)                              # [TM, H]

    # ---- one wide first-layer matmul: [TM,H] @ [H, 2H + H/2], f32 accumulation
    h_all = jnp.dot(x, w_all_ref[...],
                    preferred_element_type=jnp.float32) + b_all_ref[...]
    h_all = jnp.maximum(h_all, 0.0)                                  # shared ReLU

    two_h = w2_ref.shape[0]                                          # 2*H
    h12 = h_all[:, :two_h]                                           # [TM, 2H] f32
    h_imp = h_all[:, two_h:]                                         # [TM, H/2] f32

    # ---- importance predictor head: 1-wide output done as VPU mul + lane reduce
    imp_logit = jnp.sum(h_imp * wi2t_ref[...], axis=-1, keepdims=True) + bi2_ref[...]
    importance = jax.nn.sigmoid(imp_logit)                           # [TM, 1] f32

    # ---- both router second layers via a block-diagonal [2H, 2E] weight
    logits_both = (jnp.dot(h12.astype(jnp.bfloat16), w2_ref[...],
                           preferred_element_type=jnp.float32) + b2_ref[...])  # [TM, 2E]
    num_experts = logits_both.shape[-1] // 2
    logits_imp = logits_both[:, :num_experts]
    logits_unimp = logits_both[:, num_experts:]

    # importance gate (single vselect) + softmax (f32 throughout, exact divide)
    logits = jnp.where(importance > IMP_THRESHOLD, logits_imp, logits_unimp)
    m = jnp.max(logits, axis=-1, keepdims=True)
    e = jnp.exp(logits - m)
    s = jnp.sum(e, axis=-1, keepdims=True)
    probs = e / s                                                    # [TM, E]

    # merged output block: [TM, E+1] = probs | importance
    out_ref[:, :num_experts] = probs
    out_ref[:, num_experts:] = importance


# --------------------------------------------------------------------------- #
# Wrapper around pallas_call
# --------------------------------------------------------------------------- #
def _vmem_capacity_bytes():
    try:
        return int(pltpu.get_tpu_info().vmem_capacity_bytes)
    except Exception:
        return 64 * 1024 * 1024   # conservative (v7x-sized) fallback


def _choose_tile_m(T, vmem_cap):
    """Token-tile rows: multiple of 16, generation-aware cap (256 on 64-MiB parts)."""
    cap = 256 if vmem_cap <= 80 * 1024 * 1024 else 512
    if T >= cap:
        return cap
    return max(16, ((T + 15) // 16) * 16)


def _router_pallas(x2d, params, num_experts, tm, vmem_cap):
    """x2d: [T_pad, H] f32, T_pad a multiple of tm. Returns [T_pad, E+1] f32."""
    T, H = x2d.shape
    E = num_experts
    half = H // 2

    weight_args = (params["w_all"], params["b_all"],
                   params["wi2t"], params["bi2"],
                   params["w2"], params["b2"])

    def pinned(arr):
        # Constant index_map -> block stays resident across the whole token
        # grid; Buffered(1) disables (useless) double-buffering of the weight.
        return pl.BlockSpec(arr.shape, lambda i: (0, 0),
                            pipeline_mode=pl.Buffered(1))

    # advisory cost estimate for XLA's scheduler
    wide = params["w_all"].shape[1]                 # 2H + H/2
    flops = (2 * T * H * wide                       # fused first layer
             + 2 * T * half                         # importance VPU reduce
             + 2 * T * (2 * H) * (2 * E))           # block-diag second layer
    transcendentals = T * (E + 2)                   # sigmoid + E exps + divide
    weight_bytes = sum(int(a.size) * a.dtype.itemsize for a in weight_args)
    bytes_accessed = int(x2d.size) * 4 + weight_bytes + T * (E + 1) * 4

    # VMEM budget: weights once (single-buffered) + double-buffered x / out
    # tiles + f32 intermediates (h_all, logits/e/probs) + headroom.
    tile_in = tm * H * 4
    tile_out = tm * (E + 1) * 4
    interm = tm * (wide + 8 * E + 16) * 4
    need = weight_bytes + 2 * tile_in + 2 * tile_out + interm + (2 << 20)
    vmem_limit = int(min(int(0.85 * vmem_cap), max(8 * 1024 * 1024, need)))

    fn = pl.pallas_call(
        _router_kernel,
        out_shape=jax.ShapeDtypeStruct((T, E + 1), jnp.float32),
        grid_spec=pltpu.PrefetchScalarGridSpec(
            num_scalar_prefetch=0,
            grid=(T // tm,),
            in_specs=[pl.BlockSpec((tm, H), lambda i: (i, 0))]
                     + [pinned(a) for a in weight_args],
            out_specs=pl.BlockSpec((tm, E + 1), lambda i: (i, 0))),
        compiler_params=pltpu.CompilerParams(
            dimension_semantics=("parallel",),
            vmem_limit_bytes=vmem_limit),
        cost_estimate=pl.CostEstimate(flops=flops,
                                      transcendentals=transcendentals,
                                      bytes_accessed=bytes_accessed),
    )
    return fn(x2d, *weight_args)


# --------------------------------------------------------------------------- #
# Full forward (mirrors AdaptiveRouter.forward, expert_backend='fairscale',
# expert_mask=None)
# --------------------------------------------------------------------------- #
def adaptive_router_forward(x, params, num_experts, top_k=2, capacity_factor=1.5):
    B, S, H = x.shape
    T = B * S
    vmem_cap = _vmem_capacity_bytes()
    tm = _choose_tile_m(T, vmem_cap)
    T_pad = -(-T // tm) * tm

    x2d = x.reshape(T, H)                      # stays f32; kernel casts to bf16
    if T_pad != T:
        x2d = jnp.pad(x2d, ((0, T_pad - T), (0, 0)))

    out2d = _router_pallas(x2d, params, num_experts, tm, vmem_cap)
    probs2d = out2d[:T, :num_experts]
    imp2d = out2d[:T, num_experts:num_experts + 1]

    router_probs = probs2d.reshape(B, S, num_experts)
    importance = imp2d.reshape(B, S, 1)
    imp_mask = (importance > IMP_THRESHOLD).astype(jnp.float32)

    # top-k selection and renormalization
    topk_p, topk_i = jax.lax.top_k(router_probs, top_k)          # [B, S, k]
    topk_p = topk_p / jnp.sum(topk_p, axis=-1, keepdims=True)
    capacity = int(B * S * capacity_factor * top_k / num_experts)

    # Dense dispatch/combine scatter, mirroring the PyTorch reference
    # (including its non-accumulating expert_count quirk).
    flat_i = topk_i.reshape(T, top_k)
    flat_p = topk_p.reshape(T, top_k)
    dispatch = jnp.zeros((T, num_experts, capacity), jnp.float32)
    combine = jnp.zeros((T, num_experts, capacity), jnp.float32)
    expert_count = jnp.zeros((num_experts,), jnp.int32)
    positions = jnp.arange(T)

    for i in range(top_k):
        eidx = flat_i[:, i]                                       # [T]
        prob = flat_p[:, i]                                       # [T]
        cnt = expert_count[eidx]                                  # [T]
        mask_cap = cnt < capacity
        token_pos = jnp.clip(cnt, 0, capacity - 1)

        cur_d = dispatch[positions, eidx, token_pos]
        cur_c = combine[positions, eidx, token_pos]
        dispatch = dispatch.at[positions, eidx, token_pos].set(
            jnp.where(mask_cap, 1.0, cur_d))
        combine = combine.at[positions, eidx, token_pos].set(
            jnp.where(mask_cap, prob, cur_c))

        # PyTorch's `expert_count[idx] += 1` with duplicate indices is a
        # non-accumulating scatter: an expert gains at most +1 per iteration.
        onehot = (jax.nn.one_hot(eidx, num_experts, dtype=jnp.int32)
                  * mask_cap.astype(jnp.int32)[:, None])
        expert_count = expert_count + (jnp.sum(onehot, axis=0) > 0).astype(jnp.int32)

    dispatch = dispatch.reshape(B, S, num_experts, capacity)
    combine = combine.reshape(B, S, num_experts, capacity)

    # aux losses
    p_mean = jnp.mean(router_probs, axis=(0, 1))
    entropy_loss = jnp.sum(p_mean * jnp.log(p_mean * num_experts + 1e-9))
    imp_probs = router_probs * imp_mask
    imp_sum = jnp.sum(imp_probs, axis=(0, 1)) + 1e-9
    imp_per_expert = imp_sum / jnp.sum(imp_sum)
    imp_entropy = -jnp.sum(imp_per_expert * jnp.log(imp_per_expert + 1e-9))
    imp_entropy_norm = imp_entropy / math.log(num_experts)
    aux_loss = entropy_loss + (-0.1 * imp_entropy_norm)

    return dispatch, combine, router_probs, aux_loss, importance


# --------------------------------------------------------------------------- #
# Parameter construction (torch-Linear-style init, fused kernel layouts)
# --------------------------------------------------------------------------- #
def init_params(key, hidden_size, num_experts):
    """Deterministic synthetic weights, uniform(+/-1/sqrt(fan_in)) like torch.
    MXU weights stored [in, out] in bf16; biases and the 1-wide importance
    head stay f32 for the VPU/EUP path."""
    half = hidden_size // 2
    ks = jax.random.split(key, 12)

    def w(k, fan_in, fan_out):
        bound = 1.0 / math.sqrt(fan_in)
        return jax.random.uniform(k, (fan_in, fan_out), jnp.float32, -bound, bound)

    def b(k, fan_in, fan_out):
        bound = 1.0 / math.sqrt(fan_in)
        return jax.random.uniform(k, (1, fan_out), jnp.float32, -bound, bound)

    # importance predictor
    wi1 = w(ks[0], hidden_size, half); bi1 = b(ks[1], hidden_size, half)
    wi2 = w(ks[2], half, 1);           bi2 = b(ks[3], half, 1)
    # router_important
    wa1 = w(ks[4], hidden_size, hidden_size); ba1 = b(ks[5], hidden_size, hidden_size)
    wa2 = w(ks[6], hidden_size, num_experts); ba2 = b(ks[7], hidden_size, num_experts)
    # router_unimportant
    wb1 = w(ks[8], hidden_size, hidden_size);  bb1 = b(ks[9], hidden_size, hidden_size)
    wb2 = w(ks[10], hidden_size, num_experts); bb2 = b(ks[11], hidden_size, num_experts)

    # fused forms consumed by the kernel:
    #   w_all = [router_imp L1 | router_unimp L1 | importance L1]  -> [H, 2H + H/2]
    w_all = jnp.concatenate([wa1, wb1, wi1], axis=1)
    b_all = jnp.concatenate([ba1, bb1, bi1], axis=1)              # [1, 2H + H/2]
    #   block-diagonal second layer -> [2H, 2E]
    w2 = jnp.zeros((2 * hidden_size, 2 * num_experts), jnp.float32)
    w2 = w2.at[:hidden_size, :num_experts].set(wa2)
    w2 = w2.at[hidden_size:, num_experts:].set(wb2)
    b2 = jnp.concatenate([ba2, bb2], axis=1)                      # [1, 2E]

    # TODO(synk): the base-class nn.Sequential router is unused in
    # AdaptiveRouter.forward and is therefore not instantiated here.
    return {
        "w_all": w_all.astype(jnp.bfloat16),
        "b_all": b_all,
        "wi2t": wi2.T,            # [1, half] f32, VPU multiply+reduce operand
        "bi2": bi2,
        "w2": w2.astype(jnp.bfloat16),
        "b2": b2,
    }


if __name__ == "__main__":
    B, S, H = 2, 8, 32
    NUM_EXPERTS = 8
    TOP_K = 2

    key = jax.random.PRNGKey(0)
    k_x, k_p = jax.random.split(key)
    x = jax.random.normal(k_x, (B, S, H), dtype=jnp.float32)
    params = init_params(k_p, H, NUM_EXPERTS)

    dispatch, combine, router_probs, aux_loss, importance = adaptive_router_forward(
        x, params, NUM_EXPERTS, top_k=TOP_K, capacity_factor=1.5)

    jax.block_until_ready((dispatch, combine, router_probs, aux_loss, importance))

    # basic sanity: shapes and softmax normalization (bf16 matmuls feed the
    # logits, but the softmax itself is f32 with an exact divide).
    capacity = int(B * S * 1.5 * TOP_K / NUM_EXPERTS)
    assert dispatch.shape == (B, S, NUM_EXPERTS, capacity)
    assert combine.shape == (B, S, NUM_EXPERTS, capacity)
    assert router_probs.shape == (B, S, NUM_EXPERTS)
    assert importance.shape == (B, S, 1)
    assert bool(jnp.allclose(jnp.sum(router_probs, axis=-1), 1.0, atol=1e-3))
    assert bool(jnp.all(importance >= 0.0)) and bool(jnp.all(importance <= 1.0))

    print("KERNEL_OK")
</pallas_src>

<mosaic_0001>
module attributes {stable_mosaic.version = 11 : i64} {
  func.func @_router_kernel(%arg0: i32, %arg1: memref<16x32xf32, #tpu.memory_space<vmem>>, %arg2: memref<32x80xbf16, #tpu.memory_space<vmem>>, %arg3: memref<1x80xf32, #tpu.memory_space<vmem>>, %arg4: memref<1x16xf32, #tpu.memory_space<vmem>>, %arg5: memref<1x1xf32, #tpu.memory_space<vmem>>, %arg6: memref<64x16xbf16, #tpu.memory_space<vmem>>, %arg7: memref<1x16xf32, #tpu.memory_space<vmem>>, %arg8: memref<16x9xf32, #tpu.memory_space<vmem>>) attributes {dimension_semantics = [#tpu.dimension_semantics<parallel>], iteration_bounds = array<i64: 1>, scalar_prefetch = 0 : i64, scratch_operands = 0 : i64, tpu.core_type = #tpu.core_type<tc>, window_params = [{transform_indices = @transform_0, window_bounds = array<i64: 16, 32>}, {pipeline_mode = #tpu.pipeline_mode<synchronous>, transform_indices = @transform_1, window_bounds = array<i64: 32, 80>}, {pipeline_mode = #tpu.pipeline_mode<synchronous>, transform_indices = @transform_2, window_bounds = array<i64: 1, 80>}, {pipeline_mode = #tpu.pipeline_mode<synchronous>, transform_indices = @transform_3, window_bounds = array<i64: 1, 16>}, {pipeline_mode = #tpu.pipeline_mode<synchronous>, transform_indices = @transform_4, window_bounds = array<i64: 1, 1>}, {pipeline_mode = #tpu.pipeline_mode<synchronous>, transform_indices = @transform_5, window_bounds = array<i64: 64, 16>}, {pipeline_mode = #tpu.pipeline_mode<synchronous>, transform_indices = @transform_6, window_bounds = array<i64: 1, 16>}, {transform_indices = @transform_7, window_bounds = array<i64: 16, 9>}]} {
    %c0 = arith.constant 0 : index
    %c0_0 = arith.constant 0 : index
    %0 = vector.load %arg1[%c0, %c0_0] : memref<16x32xf32, #tpu.memory_space<vmem>>, vector<16x32xf32>
    %1 = arith.truncf %0 : vector<16x32xf32> to vector<16x32xbf16>
    %c0_1 = arith.constant 0 : index
    %c0_2 = arith.constant 0 : index
    %2 = vector.load %arg2[%c0_1, %c0_2] : memref<32x80xbf16, #tpu.memory_space<vmem>>, vector<32x80xbf16>
    %cst = arith.constant dense<0.000000e+00> : vector<16x80xf32>
    %3 = tpu.matmul %1, %2, %cst {dimension_numbers = #tpu.dot_dimension_numbers<[1], [0], [0], [1], [0, 0, 1, 1], [], []>} : vector<16x32xbf16>, vector<32x80xbf16>, vector<16x80xf32> -> vector<16x80xf32>
    %c0_3 = arith.constant 0 : index
    %c0_4 = arith.constant 0 : index
    %4 = vector.load %arg3[%c0_3, %c0_4] : memref<1x80xf32, #tpu.memory_space<vmem>>, vector<1x80xf32>
    %5 = vector.broadcast %4 : vector<1x80xf32> to vector<16x80xf32>
    %6 = arith.addf %3, %5 : vector<16x80xf32>
    %cst_5 = arith.constant 0.000000e+00 : f32
    %7 = vector.broadcast %cst_5 : f32 to vector<16x80xf32>
    %8 = arith.maximumf %6, %7 : vector<16x80xf32>
    %9 = vector.extract_strided_slice %8 {offsets = [0, 0], sizes = [16, 64], strides = [1, 1]} : vector<16x80xf32> to vector<16x64xf32>
    %10 = vector.extract_strided_slice %8 {offsets = [0, 64], sizes = [16, 16], strides = [1, 1]} : vector<16x80xf32> to vector<16x16xf32>
    %c0_6 = arith.constant 0 : index
    %c0_7 = arith.constant 0 : index
    %11 = vector.load %arg4[%c0_6, %c0_7] : memref<1x16xf32, #tpu.memory_space<vmem>>, vector<1x16xf32>
    %12 = vector.broadcast %11 : vector<1x16xf32> to vector<16x16xf32>
    %13 = arith.mulf %10, %12 : vector<16x16xf32>
    %cst_8 = arith.constant dense<0.000000e+00> : vector<16xf32>
    %14 = vector.multi_reduction <add>, %13, %cst_8 [1] : vector<16x16xf32> to vector<16xf32>
    %15 = vector.shape_cast %14 : vector<16xf32> to vector<16x1xf32>
    %c0_9 = arith.constant 0 : index
    %c0_10 = arith.constant 0 : index
    %16 = vector.load %arg5[%c0_9, %c0_10] : memref<1x1xf32, #tpu.memory_space<vmem>>, vector<1x1xf32>
    %17 = vector.broadcast %16 : vector<1x1xf32> to vector<16x1xf32>
    %18 = arith.addf %15, %17 : vector<16x1xf32>
    %19 = arith.negf %18 : vector<16x1xf32>
    %20 = math.exp %19 : vector<16x1xf32>
    %cst_11 = arith.constant 1.000000e+00 : f32
    %21 = vector.broadcast %cst_11 : f32 to vector<16x1xf32>
    %22 = arith.addf %21, %20 : vector<16x1xf32>
    %23 = arith.divf %21, %22 : vector<16x1xf32>
    %24 = arith.truncf %9 : vector<16x64xf32> to vector<16x64xbf16>
    %c0_12 = arith.constant 0 : index
    %c0_13 = arith.constant 0 : index
    %25 = vector.load %arg6[%c0_12, %c0_13] : memref<64x16xbf16, #tpu.memory_space<vmem>>, vector<64x16xbf16>
    %cst_14 = arith.constant dense<0.000000e+00> : vector<16x16xf32>
    %26 = tpu.matmul %24, %25, %cst_14 {dimension_numbers = #tpu.dot_dimension_numbers<[1], [0], [0], [1], [0, 0, 1, 1], [], []>} : vector<16x64xbf16>, vector<64x16xbf16>, vector<16x16xf32> -> vector<16x16xf32>
    %c0_15 = arith.constant 0 : index
    %c0_16 = arith.constant 0 : index
    %27 = vector.load %arg7[%c0_15, %c0_16] : memref<1x16xf32, #tpu.memory_space<vmem>>, vector<1x16xf32>
    %28 = vector.broadcast %27 : vector<1x16xf32> to vector<16x16xf32>
    %29 = arith.addf %26, %28 : vector<16x16xf32>
    %30 = vector.extract_strided_slice %29 {offsets = [0, 0], sizes = [16, 8], strides = [1, 1]} : vector<16x16xf32> to vector<16x8xf32>
    %31 = vector.extract_strided_slice %29 {offsets = [0, 8], sizes = [16, 8], strides = [1, 1]} : vector<16x16xf32> to vector<16x8xf32>
    %cst_17 = arith.constant 5.000000e-01 : f32
    %32 = vector.broadcast %cst_17 : f32 to vector<16x1xf32>
    %33 = arith.cmpf ogt, %23, %32 : vector<16x1xf32>
    %34 = vector.shape_cast %33 : vector<16x1xi1> to vector<16x1xi1>
    %35 = vector.broadcast %34 : vector<16x1xi1> to vector<16x8xi1>
    %36 = arith.select %35, %30, %31 : vector<16x8xi1>, vector<16x8xf32>
    %cst_18 = arith.constant dense<0xFF800000> : vector<16xf32>
    %37 = vector.multi_reduction <maximumf>, %36, %cst_18 [1] : vector<16x8xf32> to vector<16xf32>
    %38 = vector.shape_cast %37 : vector<16xf32> to vector<16x1xf32>
    %39 = vector.broadcast %38 : vector<16x1xf32> to vector<16x8xf32>
    %40 = arith.subf %36, %39 : vector<16x8xf32>
    %41 = math.exp %40 : vector<16x8xf32>
    %cst_19 = arith.constant dense<0.000000e+00> : vector<16xf32>
    %42 = vector.multi_reduction <add>, %41, %cst_19 [1] : vector<16x8xf32> to vector<16xf32>
    %43 = vector.shape_cast %42 : vector<16xf32> to vector<16x1xf32>
    %44 = vector.broadcast %43 : vector<16x1xf32> to vector<16x8xf32>
    %45 = arith.divf %41, %44 : vector<16x8xf32>
    %c0_20 = arith.constant 0 : index
    %c0_21 = arith.constant 0 : index
    %46 = vector.load %arg8[%c0_20, %c0_21] : memref<16x9xf32, #tpu.memory_space<vmem>>, vector<16x8xf32>
    tpu.vector_store %arg8[%c0_20, %c0_21], %45 {strides = array<i32>} : memref<16x9xf32, #tpu.memory_space<vmem>>, vector<16x8xf32>,
    %c0_22 = arith.constant 0 : index
    %c8 = arith.constant 8 : index
    %47 = vector.load %arg8[%c0_22, %c8] : memref<16x9xf32, #tpu.memory_space<vmem>>, vector<16x1xf32>
    tpu.vector_store %arg8[%c0_22, %c8], %23 {strides = array<i32>} : memref<16x9xf32, #tpu.memory_space<vmem>>, vector<16x1xf32>,
    return
  }
  func.func @transform_0(%arg0: i32) -> (i32, i32) {
    %c0_i32 = arith.constant 0 : i32
    %c0_i32_0 = arith.constant 0 : i32
    return %arg0, %c0_i32 : i32, i32
  }
  func.func @transform_1(%arg0: i32) -> (i32, i32) {
    %c0_i32 = arith.constant 0 : i32
    %c0_i32_0 = arith.constant 0 : i32
    %c0_i32_1 = arith.constant 0 : i32
    return %c0_i32, %c0_i32_0 : i32, i32
  }
  func.func @transform_2(%arg0: i32) -> (i32, i32) {
    %c0_i32 = arith.constant 0 : i32
    %c0_i32_0 = arith.constant 0 : i32
    %c0_i32_1 = arith.constant 0 : i32
    return %c0_i32, %c0_i32_0 : i32, i32
  }
  func.func @transform_3(%arg0: i32) -> (i32, i32) {
    %c0_i32 = arith.constant 0 : i32
    %c0_i32_0 = arith.constant 0 : i32
    %c0_i32_1 = arith.constant 0 : i32
    return %c0_i32, %c0_i32_0 : i32, i32
  }
  func.func @transform_4(%arg0: i32) -> (i32, i32) {
    %c0_i32 = arith.constant 0 : i32
    %c0_i32_0 = arith.constant 0 : i32
    %c0_i32_1 = arith.constant 0 : i32
    return %c0_i32, %c0_i32_0 : i32, i32
  }
  func.func @transform_5(%arg0: i32) -> (i32, i32) {
    %c0_i32 = arith.constant 0 : i32
    %c0_i32_0 = arith.constant 0 : i32
    %c0_i32_1 = arith.constant 0 : i32
    return %c0_i32, %c0_i32_0 : i32, i32
  }
  func.func @transform_6(%arg0: i32) -> (i32, i32) {
    %c0_i32 = arith.constant 0 : i32
    %c0_i32_0 = arith.constant 0 : i32
    %c0_i32_1 = arith.constant 0 : i32
    return %c0_i32, %c0_i32_0 : i32, i32
  }
  func.func @transform_7(%arg0: i32) -> (i32, i32) {
    %c0_i32 = arith.constant 0 : i32
    %c0_i32_0 = arith.constant 0 : i32
    return %arg0, %c0_i32 : i32, i32
  }
}

</mosaic_0001>

<llo_original>
// kernel: tpu_custom_call.1
$region0: #{tpu_custom_call.1}
  #allocation0 [shape = 'u32[]', space=smem, size = 0x4, offset = 0x4, fixed_abs, tag = 'smem constant byte address 0x4 - core index']
  #allocation1 [shape = 'u32[72,128]{1,0:T(1,128)}', space=vmem, size = 0x9000, scoped, tag = 'internal scratch']
  #allocation2 [shape = 'f32[1,1]{1,0:T(1,128)S(1)}', space=vmem, size = 0x200, scoped, tag = 'scoped memory for tpu_custom_call.1']
  %s0 = inlined_call_operand.vmem [shape: f32[16,32], index: 0, kind: input, shape index: {}]
  %s1 = inlined_call_operand.vmem [shape: bf16[32,80], index: 1, kind: input, shape index: {}]
  %s2 = inlined_call_operand.vmem [shape: f32[1,80], index: 2, kind: input, shape index: {}]
  %s3 = inlined_call_operand.vmem [shape: f32[1,16], index: 3, kind: input, shape index: {}]
  %s4 = inlined_call_operand.<no memory space> [shape: f32[1,1], index: 4, kind: input, shape index: {}]
  %s5 = inlined_call_operand.vmem [shape: bf16[64,16], index: 5, kind: input, shape index: {}]
  %s6 = inlined_call_operand.vmem [shape: f32[1,16], index: 6, kind: input, shape index: {}]
  %s7 = inlined_call_operand.hbm [shape: f32[16,9], index: 7, kind: output, shape index: {}]
  %s8 = sld [smem:[#allocation0]]
  $region38: #{tpu_custom_call.1} parent=0
    _
  %s10 = ssub.s32 1, %s8
  %s11 = scalar_select 0, %s10, %s8
  %v12 = vstv %s4
  %13 = vst [vmem:[#allocation2] sm:$0x1] %v12
  $region1: #{tpu_custom_call.1} parent=0
    #allocation3 [shape = 'u8[8192]{0}', space=vmem, size = 0x2000, scoped, tag = 'output window, operand 0, single buffered']
    #allocation4 [shape = 's32[1]{0}', space=sflag, size = 0x4, scoped, tag = 'scoped memory for tpu_custom_call.1']
    %14 = vsyncpa [#allocation4], 0
    // Predicated region
    $region2: #{tpu_custom_call.1} parent=1 // pred_check
      _
    $region3: #{tpu_custom_call.1} parent=1 // pred_check_branch
      %16 = sbr.rel (0) target = $region5
    $region4: #{tpu_custom_call.1} parent=1 // pred_region
      _
    $region5: #{tpu_custom_call.1} parent=1 // pred_fallthru
      _
    // Predicated region
    $region6: #{tpu_custom_call.1} parent=1 // pred_check
      _
    $region7: #{tpu_custom_call.1} parent=1 // pred_check_branch
      %18 = sbr.rel (0) target = $region9
    $region8: #{tpu_custom_call.1} parent=1 // pred_region
      _
    $region9: #{tpu_custom_call.1} parent=1 // pred_fallthru
      _
    // Predicated region
    $region10: #{tpu_custom_call.1} parent=1 // pred_check
      _
    $region11: #{tpu_custom_call.1} parent=1 // pred_check_branch
      %20 = sbr.rel (0) target = $region13
    $region12: #{tpu_custom_call.1} parent=1 // pred_region
      _
    $region13: #{tpu_custom_call.1} parent=1 // pred_fallthru
      _
    // Predicated region
    $region14: #{tpu_custom_call.1} parent=1 // pred_check
      _
    $region15: #{tpu_custom_call.1} parent=1 // pred_check_branch
      %22 = sbr.rel (0) target = $region17
    $region16: #{tpu_custom_call.1} parent=1 // pred_region
      _
    $region17: #{tpu_custom_call.1} parent=1 // pred_fallthru
      _
    // Predicated region
    $region18: #{tpu_custom_call.1} parent=1 // pred_check
      _
    $region19: #{tpu_custom_call.1} parent=1 // pred_check_branch
      %24 = sbr.rel (0) target = $region21
    $region20: #{tpu_custom_call.1} parent=1 // pred_region
      _
    $region21: #{tpu_custom_call.1} parent=1 // pred_fallthru
      _
    // Predicated region
    $region22: #{tpu_custom_call.1} parent=1 // pred_check
      _
    $region23: #{tpu_custom_call.1} parent=1 // pred_check_branch
      %26 = sbr.rel (0) target = $region25
    $region24: #{tpu_custom_call.1} parent=1 // pred_region
      _
    $region25: #{tpu_custom_call.1} parent=1 // pred_fallthru
      _
    // Predicated region
    $region26: #{tpu_custom_call.1} parent=1 // pred_check
      _
    $region27: #{tpu_custom_call.1} parent=1 // pred_check_branch
      %28 = sbr.rel (0) target = $region29
    $region28: #{tpu_custom_call.1} parent=1 // pred_region
      _
    $region29: #{tpu_custom_call.1} parent=1 // pred_fallthru
      _
    %v30 = vld [vmem:[%s0] sm:$0xff]
    %v31 = vld [vmem:[%s0 + $0x8] sm:$0xff]
    %v32 = vpack.c.bf16 %v31, %v30
    %v33 = vld [vmem:[%s1] sm:$0xf]
    %v34 = vld [vmem:[%s1 + $0x4] sm:$0xf]
    %v35 = vld [vmem:[%s1 + $0x8] sm:$0xf]
    %v36 = vld [vmem:[%s1 + $0xc] sm:$0xf]
    %v37 = vld [vmem:[%s2] sm:$0x1]
    %v39 = vperm.slane %v37, 0
    %v45 = vunpack.c.l.b16 %v33
    %v46 = vunpack.c.l.b16 %v34
    %v47 = vunpack.c.l.b16 %v35
    %v48 = vunpack.c.l.b16 %v36
    %v49 = vpack.c.b16 %v46, %v45
    %v50 = vpack.c.b16 %v48, %v47
    %vm53 = vcmask 261120
    %v55 = vsel %vm53, %v32, 0
    %57 = vmatpush.bf16.msra.mxu0 0
    %58 = vmatpush.bf16.msra.mxu0 0
    %59 = vmatpush.bf16.msra.mxu0 0
    %60 = vmatpush.bf16.msra.mxu0 0
    %61 = vmatpush.bf16.msra.mxu0 0
    %62 = vmatpush.bf16.msra.mxu0 0
    %63 = vmatpush.bf16.msra.mxu0 %v50
    %64 = vmatpush.bf16.msra.mxu0 %v49
    %65 = vmatmul.bf16.gmra.mxu0 %v55
    %v66 = vpop.f32.mrf.mxu0
    %v67 = vadd.f32 %v39, %v66
    %v68 = vpop.f32.mrf.mxu0
    %v69 = vadd.f32 %v39, %v68
    %70 = vdwg.mxu0
    %v71 = vmax.f32 %v67, 0.0
    %v72 = vmax.f32 %v69, 0.0
    %v73 = vld [vmem:[%s3] sm:$0x1]
    %v75 = vperm.slane %v73, 0
    %76 = vrot.lane.b32.xlu0 %v75, 64
    %v77 = vpop.permute.xlu0 %76
    %v79 = vmul.f32 %v71, %v77
    %v80 = vmul.f32 %v72, %v77
    %83 = vrot.lane.b32.xlu0 %v79, 64
    %v84 = vpop.permute.xlu0 %83
    %85 = vrot.lane.b32.xlu0 %v80, 64
    %v86 = vpop.permute.xlu0 %85
    %vm89 = vcmask 130048
    %v90 = vsel %vm89, %v84, 0.0
    %91 = vadd.xlane.f32.xlu0 %v90
    %v92 = vpop.xlane.xlu0 %91
    %v93 = vsel %vm89, %v86, 0.0
    %94 = vadd.xlane.f32.xlu0 %v93
    %v95 = vpop.xlane.xlu0 %94
    %v96 = vld [vmem:[#allocation2] sm:$0x1]
    %v98 = vperm.slane %v96, 0
    %v100 = vadd.f32 %v92, %v98
    %v101 = vadd.f32 %v95, %v98
    %v102 = vxor.u32 %v100, 2147483648
    %v103 = vxor.u32 %v101, 2147483648
    %v104 = vmul.f32 %v102, 1.442695
    %v105 = vpow.pop %v104
    %v106 = vmul.f32 %v103, 1.442695
    %v107 = vpow.pop %v106
    %v108 = vadd.f32 %v105, 1.0
    %v109 = vadd.f32 %v107, 1.0
    %v110 = vrcp.pop %v108
    %v111 = vmul.f32 %v108, %v110
    %v112 = vsub.f32 1.0, %v111
    %v113 = vmul.f32 %v110, %v112
    %v114 = vadd.f32 %v110, %v113
    %vm115 = vweird.f32 %v108
    %vm116 = vweird.f32 %v110
    %vm117 = vmor %vm115, %vm116
    %v118 = vsel %vm117, %v110, %v114
    %v119 = vand.u32 2147483647, %v108
    %vm120 = vcmp.eq.f32.partialorder %v119, 8.507059e+37
    %v121 = vand.u32 %v108, 2147483648
    %v122 = vor.u32 1.1754944e-38, %v121
    %v123 = vsel %vm120, %v122, %v118
    %v124 = vmul.f32 1.0, %v123
    %v125 = vrcp.pop %v109
    %v126 = vmul.f32 %v109, %v125
    %v127 = vsub.f32 1.0, %v126
    %v128 = vmul.f32 %v125, %v127
    %v129 = vadd.f32 %v125, %v128
    %vm130 = vweird.f32 %v109
    %vm131 = vweird.f32 %v125
    %vm132 = vmor %vm130, %vm131
    %v133 = vsel %vm132, %v125, %v129
    %v134 = vand.u32 2147483647, %v109
    %vm135 = vcmp.eq.f32.partialorder %v134, 8.507059e+37
    %v136 = vand.u32 %v109, 2147483648
    %v137 = vor.u32 1.1754944e-38, %v136
    %v138 = vsel %vm135, %v137, %v133
    %v139 = vmul.f32 1.0, %v138
    %v140 = vpack.c.bf16 %v72, %v71
    %v141 = vld [vmem:[%s5] sm:$0xf]
    %v142 = vld [vmem:[%s5 + $0x4] sm:$0xf]
    %v143 = vld [vmem:[%s5 + $0x8] sm:$0xf]
    %v144 = vld [vmem:[%s5 + $0xc] sm:$0xf]
    %v145 = vld [vmem:[%s5 + $0x10] sm:$0xf]
    %v146 = vld [vmem:[%s5 + $0x14] sm:$0xf]
    %v147 = vld [vmem:[%s5 + $0x18] sm:$0xf]
    %v148 = vld [vmem:[%s5 + $0x1c] sm:$0xf]
    %v149 = vld [vmem:[%s6] sm:$0x1]
    %v151 = vperm.slane %v149, 0
    %v161 = vunpack.c.l.b16 %v141
    %v162 = vunpack.c.l.b16 %v142
    %v163 = vunpack.c.l.b16 %v143
    %v164 = vunpack.c.l.b16 %v144
    %v165 = vunpack.c.l.b16 %v145
    %v166 = vunpack.c.l.b16 %v146
    %v167 = vunpack.c.l.b16 %v147
    %v168 = vunpack.c.l.b16 %v148
    %v169 = vpack.c.b16 %v162, %v161
    %v170 = vpack.c.b16 %v164, %v163
    %v171 = vpack.c.b16 %v166, %v165
    %v172 = vpack.c.b16 %v168, %v167
    %vm177 = vcmask 523264
    %v179 = vsel %vm177, %v140, 0
    %181 = vmatpush.bf16.msra.mxu0 0
    %182 = vmatpush.bf16.msra.mxu0 0
    %183 = vmatpush.bf16.msra.mxu0 0
    %184 = vmatpush.bf16.msra.mxu0 0
    %185 = vmatpush.bf16.msra.mxu0 %v172
    %186 = vmatpush.bf16.msra.mxu0 %v171
    %187 = vmatpush.bf16.msra.mxu0 %v170
    %188 = vmatpush.bf16.msra.mxu0 %v169
    %189 = vmatmul.bf16.gmra.mxu0 %v179
    %v190 = vpop.f32.mrf.mxu0
    %v191 = vadd.f32 %v151, %v190
    %v192 = vpop.f32.mrf.mxu0
    %v193 = vadd.f32 %v151, %v192
    %194 = vdwg.mxu0
    %vm195 = vcmp.gt.f32.partialorder %v124, 0.5
    %vm196 = vcmp.gt.f32.partialorder %v139, 0.5
    %v197 = vsel %vm195, 1, 0
    %v198 = vsel %vm196, 1, 0
    %199 = vset.pattern.permute.xlu0 0
    %200 = vperm.xlu0 %199, %v197
    %v201 = vpop.permute.xlu0 %200
    %202 = vset.pattern.permute.xlu0 0
    %203 = vperm.xlu0 %202, %v198
    %v204 = vpop.permute.xlu0 %203
    %vm205 = vcmp.eq.s32.totalorder %v201, 1
    %vm206 = vcmp.eq.s32.totalorder %v204, 1
    %209 = vrot.lane.b32.xlu0 %v191, 120
    %v210 = vpop.permute.xlu0 %209
    %211 = vrot.lane.b32.xlu0 %v193, 120
    %v212 = vpop.permute.xlu0 %211
    %v215 = vsel %vm205, %v191, %v210
    %v216 = vsel %vm206, %v193, %v212
    %vm217 = vcmask 64512
    %v218 = vsel %vm217, %v215, -inf
    %219 = vmax.xlane.f32.xlu0 %v218
    %v220 = vpop.xlane.xlu0 %219
    %v221 = vsel %vm217, %v216, -inf
    %222 = vmax.xlane.f32.xlu0 %v221
    %v223 = vpop.xlane.xlu0 %222
    %v224 = vsub.f32 %v215, %v220
    %v225 = vsub.f32 %v216, %v223
    %v226 = vmul.f32 %v224, 1.442695
    %v227 = vpow.pop %v226
    %v228 = vmul.f32 %v225, 1.442695
    %v229 = vpow.pop %v228
    %v230 = vsel %vm217, %v227, 0.0
    %231 = vadd.xlane.f32.xlu0 %v230
    %v232 = vpop.xlane.xlu0 %231
    %v233 = vsel %vm217, %v229, 0.0
    %234 = vadd.xlane.f32.xlu0 %v233
    %v235 = vpop.xlane.xlu0 %234
    %v236 = vrcp.pop %v232
    %v237 = vmul.f32 %v232, %v236
    %v238 = vsub.f32 1.0, %v237
    %v239 = vmul.f32 %v236, %v238
    %v240 = vadd.f32 %v236, %v239
    %vm241 = vweird.f32 %v232
    %vm242 = vweird.f32 %v236
    %vm243 = vmor %vm241, %vm242
    %v244 = vsel %vm243, %v236, %v240
    %v245 = vand.u32 2147483647, %v232
    %vm246 = vcmp.eq.f32.partialorder %v245, 8.507059e+37
    %v247 = vand.u32 %v232, 2147483648
    %v248 = vor.u32 1.1754944e-38, %v247
    %v249 = vsel %vm246, %v248, %v244
    %v250 = vmul.f32 %v227, %v249
    %v251 = vrcp.pop %v235
    %v252 = vmul.f32 %v235, %v251
    %v253 = vsub.f32 1.0, %v252
    %v254 = vmul.f32 %v251, %v253
    %v255 = vadd.f32 %v251, %v254
    %vm256 = vweird.f32 %v235
    %vm257 = vweird.f32 %v251
    %vm258 = vmor %vm256, %vm257
    %v259 = vsel %vm258, %v251, %v255
    %v260 = vand.u32 2147483647, %v235
    %vm261 = vcmp.eq.f32.partialorder %v260, 8.507059e+37
    %v262 = vand.u32 %v235, 2147483648
    %v263 = vor.u32 1.1754944e-38, %v262
    %v264 = vsel %vm261, %v263, %v259
    %v265 = vmul.f32 %v229, %v264
    %266 = vst.msk [vmem:[#allocation3] sm:$0xff] %vm217, %v250
    %267 = vst.msk [vmem:[#allocation3 + $0x8] sm:$0xff] %vm217, %v265
    %270 = vrot.lane.b32.xlu0 %v124, 8
    %v271 = vpop.permute.xlu0 %270
    %272 = vrot.lane.b32.xlu0 %v139, 8
    %v273 = vpop.permute.xlu0 %272
    %vm276 = vcmask 72768
    %277 = vst.msk [vmem:[#allocation3] sm:$0xff] %vm276, %v271
    %278 = vst.msk [vmem:[#allocation3 + $0x8] sm:$0xff] %vm276, %v273
    // Predicated region
    $region30: #{tpu_custom_call.1} parent=1 // pred_check
      _
    $region31: #{tpu_custom_call.1} parent=1 // pred_check_branch
      %280 = sbr.rel (0) target = $region33
    $region32: #{tpu_custom_call.1} parent=1 // pred_region
      %282 = vsyncadd [#allocation4], 0
      %s283 = sshll.u32 [#allocation3], 4
      %s284 = int_to_ptr.vmem [resolvable:$true] %s283
      %s285 = sshll.u32 %s7, 4
      %s286 = int_to_ptr.hbm [resolvable:$true] %s285
      %291 = dma.vmem_to_hbm [thread:$0]  %s284, 256, %s286, [#allocation4], 128, 128, 8
    $region33: #{tpu_custom_call.1} parent=1 // pred_fallthru
      _
    // Predicated region
    $region34: #{tpu_custom_call.1} parent=1 // pred_check
      _
    $region35: #{tpu_custom_call.1} parent=1 // pred_check_branch
      %293 = sbr.rel (0) target = $region37
    $region36: #{tpu_custom_call.1} parent=1 // pred_region
      %295 = dma.done [#allocation4], 256
    $region37: #{tpu_custom_call.1} parent=1 // pred_fallthru
      _
    %296 = vsyncpa [#allocation4], 1

</llo_original>
